<compile_context>
chip_gen: v7x
topology: tpu7x:2x2x1
jax: 0.10.0
libtpu: 0.0.40
codegen_flags: <defaults>
</compile_context>

<pallas_src>
import jax
import jax.numpy as jnp
from jax.experimental import pallas as pl
from jax.experimental.pallas import tpu as pltpu

HID = 128


def _round_up(n, m):
    return ((n + m - 1) // m) * m


def icm_kernel(
    # batch-tiled activations (bf16)
    state_ref, next_state_ref, action_ref,
    # VMEM-resident weights (bf16) and biases (f32)
    enc_w1_ref, enc_b1_ref, enc_w2_ref, enc_b2_ref,
    w1_sf_ref, inv_w1n_ref, inv_b1_ref, inv_w2_ref, inv_b2_ref,
    fwd_w1a_ref, fwd_b1_ref, fwd_w2_ref, fwd_b2_ref,
    # outputs (f32)
    state_feat_ref, next_state_feat_ref, action_pred_ref, next_state_pred_ref,
):
    tb = state_ref.shape[0]

    # --- shared encoder: run once on [state ; next_state] stacked on sublanes ---
    x = jnp.concatenate([state_ref[...], next_state_ref[...]], axis=0)      # (2TB, S) bf16
    h = jnp.dot(x, enc_w1_ref[...], preferred_element_type=jnp.float32) + enc_b1_ref[...]
    h = jnp.maximum(h, 0.0).astype(jnp.bfloat16)
    feat = jnp.dot(h, enc_w2_ref[...], preferred_element_type=jnp.float32) + enc_b2_ref[...]
    sf, nsf = feat[:tb], feat[tb:]                                          # (TB, 128) f32
    state_feat_ref[...] = sf
    next_state_feat_ref[...] = nsf

    sf_bf = sf.astype(jnp.bfloat16)
    nsf_bf = nsf.astype(jnp.bfloat16)

    # --- fused first layers that consume sf: one (TB,128)@(128,256) matmul ---
    both = jnp.dot(sf_bf, w1_sf_ref[...], preferred_element_type=jnp.float32)  # (TB, 256)

    # inverse model: Linear(256,128) on cat(sf, nsf) -> ReLU -> Linear(128, A_pad)
    h_inv = jnp.maximum(
        both[:, :HID]
        + jnp.dot(nsf_bf, inv_w1n_ref[...], preferred_element_type=jnp.float32)
        + inv_b1_ref[...],
        0.0,
    ).astype(jnp.bfloat16)
    action_pred_ref[...] = (
        jnp.dot(h_inv, inv_w2_ref[...], preferred_element_type=jnp.float32)
        + inv_b2_ref[...]
    )

    # forward model: Linear(128+A,128) on cat(sf, action) -> ReLU -> Linear(128,128)
    h_fwd = jnp.maximum(
        both[:, HID:]
        + jnp.dot(action_ref[...], fwd_w1a_ref[...], preferred_element_type=jnp.float32)
        + fwd_b1_ref[...],
        0.0,
    ).astype(jnp.bfloat16)
    next_state_pred_ref[...] = (
        jnp.dot(h_fwd, fwd_w2_ref[...], preferred_element_type=jnp.float32)
        + fwd_b2_ref[...]
    )


def init_icm_params(key, state_dim, action_dim):
    """PyTorch nn.Linear-style init: U(-1/sqrt(fan_in), 1/sqrt(fan_in)).

    Weights stored as (in, out) so the kernel does x @ W (== PyTorch x @ W.T)."""
    def linear(k, fan_in, fan_out):
        kw, kb = jax.random.split(k)
        bound = 1.0 / jnp.sqrt(jnp.float32(fan_in))
        w = jax.random.uniform(kw, (fan_in, fan_out), jnp.float32, -bound, bound)
        b = jax.random.uniform(kb, (1, fan_out), jnp.float32, -bound, bound)
        return w, b

    keys = jax.random.split(key, 6)
    enc_w1, enc_b1 = linear(keys[0], state_dim, HID)
    enc_w2, enc_b2 = linear(keys[1], HID, HID)
    fwd_w1, fwd_b1 = linear(keys[2], HID + action_dim, HID)
    fwd_w2, fwd_b2 = linear(keys[3], HID, HID)
    inv_w1, inv_b1 = linear(keys[4], 2 * HID, HID)
    inv_w2, inv_b2 = linear(keys[5], HID, action_dim)
    return dict(enc_w1=enc_w1, enc_b1=enc_b1, enc_w2=enc_w2, enc_b2=enc_b2,
                fwd_w1=fwd_w1, fwd_b1=fwd_b1, fwd_w2=fwd_w2, fwd_b2=fwd_b2,
                inv_w1=inv_w1, inv_b1=inv_b1, inv_w2=inv_w2, inv_b2=inv_b2)


def pack_icm_params(params):
    """One-time packing for the kernel: split the cat-weights, fuse the two
    sf-consuming first layers along N, pad A to a lane-dense 128, cast weights
    to bf16 (biases stay f32)."""
    bf16 = jnp.bfloat16
    A = params["inv_w2"].shape[1]
    AP = _round_up(A, 128)
    inv_w2p = jnp.zeros((HID, AP), jnp.float32).at[:, :A].set(params["inv_w2"])
    inv_b2p = jnp.zeros((1, AP), jnp.float32).at[:, :A].set(params["inv_b2"])
    # columns [:128] -> inverse-model first layer (sf part), [128:] -> forward-model (sf part)
    w1_sf = jnp.concatenate([params["inv_w1"][:HID], params["fwd_w1"][:HID]], axis=1)
    return dict(
        enc_w1=params["enc_w1"].astype(bf16), enc_b1=params["enc_b1"],
        enc_w2=params["enc_w2"].astype(bf16), enc_b2=params["enc_b2"],
        w1_sf=w1_sf.astype(bf16),
        inv_w1n=params["inv_w1"][HID:].astype(bf16), inv_b1=params["inv_b1"],
        inv_w2p=inv_w2p.astype(bf16), inv_b2p=inv_b2p,
        fwd_w1a=params["fwd_w1"][HID:].astype(bf16), fwd_b1=params["fwd_b1"],
        fwd_w2=params["fwd_w2"].astype(bf16), fwd_b2=params["fwd_b2"],
    )


@jax.jit
def icm_forward(state, next_state, action, packed):
    # --- glue mirroring the PyTorch dim/broadcast handling --------------------
    if state.ndim == 1:
        state = state[None, :]
    if next_state.ndim == 1:
        next_state = next_state[None, :]
    if action.ndim == 1:
        action = action[None, :]
    if action.shape[0] != state.shape[0]:
        action = jnp.broadcast_to(action, (state.shape[0], action.shape[1]))
    # TODO(synk): the PyTorch zero-padding branch for state_action_feat (and the
    # debug print statements) are unreachable / side-effect-only with consistent
    # shapes; the feature-dim concat is expressed as split matmuls instead.

    B, S = state.shape
    A = action.shape[1]
    AP = packed["inv_w2p"].shape[1]

    # batch tiling: TB multiple of 16 (bf16 sublane packing); capped at 512 to
    # amortize per-grid-step overhead while staying far under the VMEM budget
    # (double-buffered activation tiles ~2 MiB at TB=512, v7x has 64 MiB).
    TB = min(512, _round_up(B, 16))
    B_pad = _round_up(B, TB)
    grid = (B_pad // TB,)

    def pad_rows(x):
        pad = B_pad - x.shape[0]
        return jnp.pad(x, ((0, pad), (0, 0))) if pad else x

    state_b = pad_rows(state.astype(jnp.bfloat16))
    next_state_b = pad_rows(next_state.astype(jnp.bfloat16))
    action_b = pad_rows(action.astype(jnp.bfloat16))

    def tile_spec(last):                 # batch-tiled activation / output block
        return pl.BlockSpec((TB, last), lambda i: (i, 0))

    def resident_spec(shape):            # VMEM-resident weight/bias (no re-DMA)
        return pl.BlockSpec(shape, lambda i: (0, 0))

    weight_order = ["enc_w1", "enc_b1", "enc_w2", "enc_b2",
                    "w1_sf", "inv_w1n", "inv_b1", "inv_w2p", "inv_b2p",
                    "fwd_w1a", "fwd_b1", "fwd_w2", "fwd_b2"]
    weights = [packed[k] for k in weight_order]

    inputs = [state_b, next_state_b, action_b] + weights
    in_specs = ([tile_spec(S), tile_spec(S), tile_spec(A)]
                + [resident_spec(w.shape) for w in weights])

    out_shapes = (
        jax.ShapeDtypeStruct((B_pad, HID), jnp.float32),   # state_feat
        jax.ShapeDtypeStruct((B_pad, HID), jnp.float32),   # next_state_feat
        jax.ShapeDtypeStruct((B_pad, AP), jnp.float32),    # action_pred (A padded to 128)
        jax.ShapeDtypeStruct((B_pad, HID), jnp.float32),   # next_state_pred
    )
    out_specs = (tile_spec(HID), tile_spec(HID), tile_spec(AP), tile_spec(HID))

    sf, nsf, ap, nsp = pl.pallas_call(
        icm_kernel,
        grid=grid,
        out_shape=out_shapes,
        in_specs=in_specs,
        out_specs=out_specs,
        compiler_params=pltpu.CompilerParams(
            dimension_semantics=("parallel",),          # megacore sharding on v7x
            vmem_limit_bytes=32 * 1024 * 1024,
        ),
    )(*inputs)

    return sf[:B], nsf[:B], ap[:B, :A], nsp[:B]


def icm_forward_ref_packed(state, next_state, action, packed):
    """Plain-JAX reference with the SAME numerics as the kernel
    (bf16 operands, f32 MXU accumulation, f32 epilogue)."""
    bf16 = jnp.bfloat16

    def mm(x, w):
        return jnp.dot(x.astype(bf16), w, preferred_element_type=jnp.float32)

    def encode(x):
        h = jnp.maximum(mm(x, packed["enc_w1"]) + packed["enc_b1"], 0.0)
        return mm(h, packed["enc_w2"]) + packed["enc_b2"]

    sf, nsf = encode(state), encode(next_state)
    both = mm(sf, packed["w1_sf"])
    h_inv = jnp.maximum(both[:, :HID] + mm(nsf, packed["inv_w1n"]) + packed["inv_b1"], 0.0)
    A = action.shape[1]
    action_pred = (mm(h_inv, packed["inv_w2p"]) + packed["inv_b2p"])[:, :A]
    h_fwd = jnp.maximum(both[:, HID:] + mm(action, packed["fwd_w1a"]) + packed["fwd_b1"], 0.0)
    next_state_pred = mm(h_fwd, packed["fwd_w2"]) + packed["fwd_b2"]
    return sf, nsf, action_pred, next_state_pred


def icm_forward_ref_f32(state, next_state, action, params):
    """Pure f32 reference of the original module (loose semantic check)."""
    def encode(x):
        h = jnp.maximum(x @ params["enc_w1"] + params["enc_b1"], 0.0)
        return h @ params["enc_w2"] + params["enc_b2"]

    sf, nsf = encode(state), encode(next_state)
    h_inv = jnp.maximum(
        jnp.concatenate([sf, nsf], axis=1) @ params["inv_w1"] + params["inv_b1"], 0.0)
    action_pred = h_inv @ params["inv_w2"] + params["inv_b2"]
    h_fwd = jnp.maximum(
        jnp.concatenate([sf, action], axis=1) @ params["fwd_w1"] + params["fwd_b1"], 0.0)
    next_state_pred = h_fwd @ params["fwd_w2"] + params["fwd_b2"]
    return sf, nsf, action_pred, next_state_pred


if __name__ == "__main__":
    B, STATE_DIM, ACTION_DIM = 2, 32, 4

    key = jax.random.PRNGKey(0)
    k_params, k_s, k_ns, k_a = jax.random.split(key, 4)

    params = init_icm_params(k_params, STATE_DIM, ACTION_DIM)
    packed = pack_icm_params(params)

    state = jax.random.normal(k_s, (B, STATE_DIM), jnp.float32)
    next_state = jax.random.normal(k_ns, (B, STATE_DIM), jnp.float32)
    action = jax.random.normal(k_a, (B, ACTION_DIM), jnp.float32)

    outs = icm_forward(state, next_state, action, packed)
    outs = jax.block_until_ready(outs)

    # exact-numerics reference (same bf16/f32 mix as the kernel)
    refs = icm_forward_ref_packed(state, next_state, action, packed)
    for o, r in zip(outs, refs):
        assert o.shape == r.shape and o.dtype == r.dtype
        assert jnp.allclose(o, r, atol=2e-3, rtol=2e-3), float(jnp.max(jnp.abs(o - r)))

    # loose semantic check against the pure-f32 module
    refs32 = icm_forward_ref_f32(state, next_state, action, params)
    for o, r in zip(outs, refs32):
        assert jnp.allclose(o, r, atol=1e-1, rtol=1e-1), float(jnp.max(jnp.abs(o - r)))

    # intrinsic_reward equivalent (glue, outside the kernel)
    _reward = jnp.mean((outs[1] - outs[3]) ** 2, axis=1)
    _reward = jax.block_until_ready(_reward)

    print("KERNEL_OK")
</pallas_src>

<mosaic_0001>
module attributes {stable_mosaic.version = 11 : i64} {
  func.func @icm_kernel(%arg0: i32, %arg1: memref<16x32xbf16, #tpu.memory_space<vmem>>, %arg2: memref<16x32xbf16, #tpu.memory_space<vmem>>, %arg3: memref<16x4xbf16, #tpu.memory_space<vmem>>, %arg4: memref<32x128xbf16, #tpu.memory_space<vmem>>, %arg5: memref<1x128xf32, #tpu.memory_space<vmem>>, %arg6: memref<128x128xbf16, #tpu.memory_space<vmem>>, %arg7: memref<1x128xf32, #tpu.memory_space<vmem>>, %arg8: memref<128x256xbf16, #tpu.memory_space<vmem>>, %arg9: memref<128x128xbf16, #tpu.memory_space<vmem>>, %arg10: memref<1x128xf32, #tpu.memory_space<vmem>>, %arg11: memref<128x128xbf16, #tpu.memory_space<vmem>>, %arg12: memref<1x128xf32, #tpu.memory_space<vmem>>, %arg13: memref<4x128xbf16, #tpu.memory_space<vmem>>, %arg14: memref<1x128xf32, #tpu.memory_space<vmem>>, %arg15: memref<128x128xbf16, #tpu.memory_space<vmem>>, %arg16: memref<1x128xf32, #tpu.memory_space<vmem>>, %arg17: memref<16x128xf32, #tpu.memory_space<vmem>>, %arg18: memref<16x128xf32, #tpu.memory_space<vmem>>, %arg19: memref<16x128xf32, #tpu.memory_space<vmem>>, %arg20: memref<16x128xf32, #tpu.memory_space<vmem>>) attributes {dimension_semantics = [#tpu.dimension_semantics<parallel>], iteration_bounds = array<i64: 1>, scalar_prefetch = 0 : i64, scratch_operands = 0 : i64, tpu.core_type = #tpu.core_type<tc>, window_params = [{transform_indices = @transform_0, window_bounds = array<i64: 16, 32>}, {transform_indices = @transform_1, window_bounds = array<i64: 16, 32>}, {transform_indices = @transform_2, window_bounds = array<i64: 16, 4>}, {pipeline_mode = #tpu.pipeline_mode<synchronous>, transform_indices = @transform_3, window_bounds = array<i64: 32, 128>}, {pipeline_mode = #tpu.pipeline_mode<synchronous>, transform_indices = @transform_4, window_bounds = array<i64: 1, 128>}, {pipeline_mode = #tpu.pipeline_mode<synchronous>, transform_indices = @transform_5, window_bounds = array<i64: 128, 128>}, {pipeline_mode = #tpu.pipeline_mode<synchronous>, transform_indices = @transform_6, window_bounds = array<i64: 1, 128>}, {pipeline_mode = #tpu.pipeline_mode<synchronous>, transform_indices = @transform_7, window_bounds = array<i64: 128, 256>}, {pipeline_mode = #tpu.pipeline_mode<synchronous>, transform_indices = @transform_8, window_bounds = array<i64: 128, 128>}, {pipeline_mode = #tpu.pipeline_mode<synchronous>, transform_indices = @transform_9, window_bounds = array<i64: 1, 128>}, {pipeline_mode = #tpu.pipeline_mode<synchronous>, transform_indices = @transform_10, window_bounds = array<i64: 128, 128>}, {pipeline_mode = #tpu.pipeline_mode<synchronous>, transform_indices = @transform_11, window_bounds = array<i64: 1, 128>}, {pipeline_mode = #tpu.pipeline_mode<synchronous>, transform_indices = @transform_12, window_bounds = array<i64: 4, 128>}, {pipeline_mode = #tpu.pipeline_mode<synchronous>, transform_indices = @transform_13, window_bounds = array<i64: 1, 128>}, {pipeline_mode = #tpu.pipeline_mode<synchronous>, transform_indices = @transform_14, window_bounds = array<i64: 128, 128>}, {pipeline_mode = #tpu.pipeline_mode<synchronous>, transform_indices = @transform_15, window_bounds = array<i64: 1, 128>}, {transform_indices = @transform_16, window_bounds = array<i64: 16, 128>}, {transform_indices = @transform_17, window_bounds = array<i64: 16, 128>}, {transform_indices = @transform_18, window_bounds = array<i64: 16, 128>}, {transform_indices = @transform_19, window_bounds = array<i64: 16, 128>}]} {
    %c0 = arith.constant 0 : index
    %c0_0 = arith.constant 0 : index
    %0 = vector.load %arg1[%c0, %c0_0] : memref<16x32xbf16, #tpu.memory_space<vmem>>, vector<16x32xbf16>
    %c0_1 = arith.constant 0 : index
    %c0_2 = arith.constant 0 : index
    %1 = vector.load %arg2[%c0_1, %c0_2] : memref<16x32xbf16, #tpu.memory_space<vmem>>, vector<16x32xbf16>
    %2 = tpu.concatenate %0, %1 in 0 : vector<16x32xbf16>, vector<16x32xbf16> -> vector<32x32xbf16>
    %c0_3 = arith.constant 0 : index
    %c0_4 = arith.constant 0 : index
    %3 = vector.load %arg4[%c0_3, %c0_4] : memref<32x128xbf16, #tpu.memory_space<vmem>>, vector<32x128xbf16>
    %cst = arith.constant dense<0.000000e+00> : vector<32x128xf32>
    %4 = tpu.matmul %2, %3, %cst {dimension_numbers = #tpu.dot_dimension_numbers<[1], [0], [0], [1], [0, 0, 1, 1], [], []>} : vector<32x32xbf16>, vector<32x128xbf16>, vector<32x128xf32> -> vector<32x128xf32>
    %c0_5 = arith.constant 0 : index
    %c0_6 = arith.constant 0 : index
    %5 = vector.load %arg5[%c0_5, %c0_6] : memref<1x128xf32, #tpu.memory_space<vmem>>, vector<1x128xf32>
    %6 = vector.broadcast %5 : vector<1x128xf32> to vector<32x128xf32>
    %7 = arith.addf %4, %6 : vector<32x128xf32>
    %cst_7 = arith.constant 0.000000e+00 : f32
    %8 = vector.broadcast %cst_7 : f32 to vector<32x128xf32>
    %9 = arith.maximumf %7, %8 : vector<32x128xf32>
    %10 = arith.truncf %9 : vector<32x128xf32> to vector<32x128xbf16>
    %c0_8 = arith.constant 0 : index
    %c0_9 = arith.constant 0 : index
    %11 = vector.load %arg6[%c0_8, %c0_9] : memref<128x128xbf16, #tpu.memory_space<vmem>>, vector<128x128xbf16>
    %cst_10 = arith.constant dense<0.000000e+00> : vector<32x128xf32>
    %12 = tpu.matmul %10, %11, %cst_10 {dimension_numbers = #tpu.dot_dimension_numbers<[1], [0], [0], [1], [0, 0, 1, 1], [], []>} : vector<32x128xbf16>, vector<128x128xbf16>, vector<32x128xf32> -> vector<32x128xf32>
    %c0_11 = arith.constant 0 : index
    %c0_12 = arith.constant 0 : index
    %13 = vector.load %arg7[%c0_11, %c0_12] : memref<1x128xf32, #tpu.memory_space<vmem>>, vector<1x128xf32>
    %14 = vector.broadcast %13 : vector<1x128xf32> to vector<32x128xf32>
    %15 = arith.addf %12, %14 : vector<32x128xf32>
    %16 = vector.extract_strided_slice %15 {offsets = [0, 0], sizes = [16, 128], strides = [1, 1]} : vector<32x128xf32> to vector<16x128xf32>
    %17 = vector.extract_strided_slice %15 {offsets = [16, 0], sizes = [16, 128], strides = [1, 1]} : vector<32x128xf32> to vector<16x128xf32>
    %c0_13 = arith.constant 0 : index
    %c0_14 = arith.constant 0 : index
    %18 = vector.load %arg17[%c0_13, %c0_14] : memref<16x128xf32, #tpu.memory_space<vmem>>, vector<16x128xf32>
    tpu.vector_store %arg17[%c0_13, %c0_14], %16 {strides = array<i32>} : memref<16x128xf32, #tpu.memory_space<vmem>>, vector<16x128xf32>,
    %c0_15 = arith.constant 0 : index
    %c0_16 = arith.constant 0 : index
    %19 = vector.load %arg18[%c0_15, %c0_16] : memref<16x128xf32, #tpu.memory_space<vmem>>, vector<16x128xf32>
    tpu.vector_store %arg18[%c0_15, %c0_16], %17 {strides = array<i32>} : memref<16x128xf32, #tpu.memory_space<vmem>>, vector<16x128xf32>,
    %20 = arith.truncf %16 : vector<16x128xf32> to vector<16x128xbf16>
    %21 = arith.truncf %17 : vector<16x128xf32> to vector<16x128xbf16>
    %c0_17 = arith.constant 0 : index
    %c0_18 = arith.constant 0 : index
    %22 = vector.load %arg8[%c0_17, %c0_18] : memref<128x256xbf16, #tpu.memory_space<vmem>>, vector<128x256xbf16>
    %cst_19 = arith.constant dense<0.000000e+00> : vector<16x256xf32>
    %23 = tpu.matmul %20, %22, %cst_19 {dimension_numbers = #tpu.dot_dimension_numbers<[1], [0], [0], [1], [0, 0, 1, 1], [], []>} : vector<16x128xbf16>, vector<128x256xbf16>, vector<16x256xf32> -> vector<16x256xf32>
    %24 = vector.extract_strided_slice %23 {offsets = [0, 0], sizes = [16, 128], strides = [1, 1]} : vector<16x256xf32> to vector<16x128xf32>
    %c0_20 = arith.constant 0 : index
    %c0_21 = arith.constant 0 : index
    %25 = vector.load %arg9[%c0_20, %c0_21] : memref<128x128xbf16, #tpu.memory_space<vmem>>, vector<128x128xbf16>
    %cst_22 = arith.constant dense<0.000000e+00> : vector<16x128xf32>
    %26 = tpu.matmul %21, %25, %cst_22 {dimension_numbers = #tpu.dot_dimension_numbers<[1], [0], [0], [1], [0, 0, 1, 1], [], []>} : vector<16x128xbf16>, vector<128x128xbf16>, vector<16x128xf32> -> vector<16x128xf32>
    %27 = arith.addf %24, %26 : vector<16x128xf32>
    %c0_23 = arith.constant 0 : index
    %c0_24 = arith.constant 0 : index
    %28 = vector.load %arg10[%c0_23, %c0_24] : memref<1x128xf32, #tpu.memory_space<vmem>>, vector<1x128xf32>
    %29 = vector.broadcast %28 : vector<1x128xf32> to vector<16x128xf32>
    %30 = arith.addf %27, %29 : vector<16x128xf32>
    %cst_25 = arith.constant 0.000000e+00 : f32
    %31 = vector.broadcast %cst_25 : f32 to vector<16x128xf32>
    %32 = arith.maximumf %30, %31 : vector<16x128xf32>
    %33 = arith.truncf %32 : vector<16x128xf32> to vector<16x128xbf16>
    %c0_26 = arith.constant 0 : index
    %c0_27 = arith.constant 0 : index
    %34 = vector.load %arg11[%c0_26, %c0_27] : memref<128x128xbf16, #tpu.memory_space<vmem>>, vector<128x128xbf16>
    %cst_28 = arith.constant dense<0.000000e+00> : vector<16x128xf32>
    %35 = tpu.matmul %33, %34, %cst_28 {dimension_numbers = #tpu.dot_dimension_numbers<[1], [0], [0], [1], [0, 0, 1, 1], [], []>} : vector<16x128xbf16>, vector<128x128xbf16>, vector<16x128xf32> -> vector<16x128xf32>
    %c0_29 = arith.constant 0 : index
    %c0_30 = arith.constant 0 : index
    %36 = vector.load %arg12[%c0_29, %c0_30] : memref<1x128xf32, #tpu.memory_space<vmem>>, vector<1x128xf32>
    %37 = vector.broadcast %36 : vector<1x128xf32> to vector<16x128xf32>
    %38 = arith.addf %35, %37 : vector<16x128xf32>
    %c0_31 = arith.constant 0 : index
    %c0_32 = arith.constant 0 : index
    %39 = vector.load %arg19[%c0_31, %c0_32] : memref<16x128xf32, #tpu.memory_space<vmem>>, vector<16x128xf32>
    tpu.vector_store %arg19[%c0_31, %c0_32], %38 {strides = array<i32>} : memref<16x128xf32, #tpu.memory_space<vmem>>, vector<16x128xf32>,
    %40 = vector.extract_strided_slice %23 {offsets = [0, 128], sizes = [16, 128], strides = [1, 1]} : vector<16x256xf32> to vector<16x128xf32>
    %c0_33 = arith.constant 0 : index
    %c0_34 = arith.constant 0 : index
    %41 = vector.load %arg3[%c0_33, %c0_34] : memref<16x4xbf16, #tpu.memory_space<vmem>>, vector<16x4xbf16>
    %c0_35 = arith.constant 0 : index
    %c0_36 = arith.constant 0 : index
    %42 = vector.load %arg13[%c0_35, %c0_36] : memref<4x128xbf16, #tpu.memory_space<vmem>>, vector<4x128xbf16>
    %cst_37 = arith.constant dense<0.000000e+00> : vector<16x128xf32>
    %43 = tpu.matmul %41, %42, %cst_37 {dimension_numbers = #tpu.dot_dimension_numbers<[1], [0], [0], [1], [0, 0, 1, 1], [], []>} : vector<16x4xbf16>, vector<4x128xbf16>, vector<16x128xf32> -> vector<16x128xf32>
    %44 = arith.addf %40, %43 : vector<16x128xf32>
    %c0_38 = arith.constant 0 : index
    %c0_39 = arith.constant 0 : index
    %45 = vector.load %arg14[%c0_38, %c0_39] : memref<1x128xf32, #tpu.memory_space<vmem>>, vector<1x128xf32>
    %46 = vector.broadcast %45 : vector<1x128xf32> to vector<16x128xf32>
    %47 = arith.addf %44, %46 : vector<16x128xf32>
    %cst_40 = arith.constant 0.000000e+00 : f32
    %48 = vector.broadcast %cst_40 : f32 to vector<16x128xf32>
    %49 = arith.maximumf %47, %48 : vector<16x128xf32>
    %50 = arith.truncf %49 : vector<16x128xf32> to vector<16x128xbf16>
    %c0_41 = arith.constant 0 : index
    %c0_42 = arith.constant 0 : index
    %51 = vector.load %arg15[%c0_41, %c0_42] : memref<128x128xbf16, #tpu.memory_space<vmem>>, vector<128x128xbf16>
    %cst_43 = arith.constant dense<0.000000e+00> : vector<16x128xf32>
    %52 = tpu.matmul %50, %51, %cst_43 {dimension_numbers = #tpu.dot_dimension_numbers<[1], [0], [0], [1], [0, 0, 1, 1], [], []>} : vector<16x128xbf16>, vector<128x128xbf16>, vector<16x128xf32> -> vector<16x128xf32>
    %c0_44 = arith.constant 0 : index
    %c0_45 = arith.constant 0 : index
    %53 = vector.load %arg16[%c0_44, %c0_45] : memref<1x128xf32, #tpu.memory_space<vmem>>, vector<1x128xf32>
    %54 = vector.broadcast %53 : vector<1x128xf32> to vector<16x128xf32>
    %55 = arith.addf %52, %54 : vector<16x128xf32>
    %c0_46 = arith.constant 0 : index
    %c0_47 = arith.constant 0 : index
    %56 = vector.load %arg20[%c0_46, %c0_47] : memref<16x128xf32, #tpu.memory_space<vmem>>, vector<16x128xf32>
    tpu.vector_store %arg20[%c0_46, %c0_47], %55 {strides = array<i32>} : memref<16x128xf32, #tpu.memory_space<vmem>>, vector<16x128xf32>,
    return
  }
  func.func @transform_0(%arg0: i32) -> (i32, i32) {
    %c0_i32 = arith.constant 0 : i32
    %c0_i32_0 = arith.constant 0 : i32
    return %arg0, %c0_i32 : i32, i32
  }
  func.func @transform_1(%arg0: i32) -> (i32, i32) {
    %c0_i32 = arith.constant 0 : i32
    %c0_i32_0 = arith.constant 0 : i32
    return %arg0, %c0_i32 : i32, i32
  }
  func.func @transform_2(%arg0: i32) -> (i32, i32) {
    %c0_i32 = arith.constant 0 : i32
    %c0_i32_0 = arith.constant 0 : i32
    return %arg0, %c0_i32 : i32, i32
  }
  func.func @transform_3(%arg0: i32) -> (i32, i32) {
    %c0_i32 = arith.constant 0 : i32
    %c0_i32_0 = arith.constant 0 : i32
    %c0_i32_1 = arith.constant 0 : i32
    return %c0_i32, %c0_i32_0 : i32, i32
  }
  func.func @transform_4(%arg0: i32) -> (i32, i32) {
    %c0_i32 = arith.constant 0 : i32
    %c0_i32_0 = arith.constant 0 : i32
    %c0_i32_1 = arith.constant 0 : i32
    return %c0_i32, %c0_i32_0 : i32, i32
  }
  func.func @transform_5(%arg0: i32) -> (i32, i32) {
    %c0_i32 = arith.constant 0 : i32
    %c0_i32_0 = arith.constant 0 : i32
    %c0_i32_1 = arith.constant 0 : i32
    return %c0_i32, %c0_i32_0 : i32, i32
  }
  func.func @transform_6(%arg0: i32) -> (i32, i32) {
    %c0_i32 = arith.constant 0 : i32
    %c0_i32_0 = arith.constant 0 : i32
    %c0_i32_1 = arith.constant 0 : i32
    return %c0_i32, %c0_i32_0 : i32, i32
  }
  func.func @transform_7(%arg0: i32) -> (i32, i32) {
    %c0_i32 = arith.constant 0 : i32
    %c0_i32_0 = arith.constant 0 : i32
    %c0_i32_1 = arith.constant 0 : i32
    return %c0_i32, %c0_i32_0 : i32, i32
  }
  func.func @transform_8(%arg0: i32) -> (i32, i32) {
    %c0_i32 = arith.constant 0 : i32
    %c0_i32_0 = arith.constant 0 : i32
    %c0_i32_1 = arith.constant 0 : i32
    return %c0_i32, %c0_i32_0 : i32, i32
  }
  func.func @transform_9(%arg0: i32) -> (i32, i32) {
    %c0_i32 = arith.constant 0 : i32
    %c0_i32_0 = arith.constant 0 : i32
    %c0_i32_1 = arith.constant 0 : i32
    return %c0_i32, %c0_i32_0 : i32, i32
  }
  func.func @transform_10(%arg0: i32) -> (i32, i32) {
    %c0_i32 = arith.constant 0 : i32
    %c0_i32_0 = arith.constant 0 : i32
    %c0_i32_1 = arith.constant 0 : i32
    return %c0_i32, %c0_i32_0 : i32, i32
  }
  func.func @transform_11(%arg0: i32) -> (i32, i32) {
    %c0_i32 = arith.constant 0 : i32
    %c0_i32_0 = arith.constant 0 : i32
    %c0_i32_1 = arith.constant 0 : i32
    return %c0_i32, %c0_i32_0 : i32, i32
  }
  func.func @transform_12(%arg0: i32) -> (i32, i32) {
    %c0_i32 = arith.constant 0 : i32
    %c0_i32_0 = arith.constant 0 : i32
    %c0_i32_1 = arith.constant 0 : i32
    return %c0_i32, %c0_i32_0 : i32, i32
  }
  func.func @transform_13(%arg0: i32) -> (i32, i32) {
    %c0_i32 = arith.constant 0 : i32
    %c0_i32_0 = arith.constant 0 : i32
    %c0_i32_1 = arith.constant 0 : i32
    return %c0_i32, %c0_i32_0 : i32, i32
  }
  func.func @transform_14(%arg0: i32) -> (i32, i32) {
    %c0_i32 = arith.constant 0 : i32
    %c0_i32_0 = arith.constant 0 : i32
    %c0_i32_1 = arith.constant 0 : i32
    return %c0_i32, %c0_i32_0 : i32, i32
  }
  func.func @transform_15(%arg0: i32) -> (i32, i32) {
    %c0_i32 = arith.constant 0 : i32
    %c0_i32_0 = arith.constant 0 : i32
    %c0_i32_1 = arith.constant 0 : i32
    return %c0_i32, %c0_i32_0 : i32, i32
  }
  func.func @transform_16(%arg0: i32) -> (i32, i32) {
    %c0_i32 = arith.constant 0 : i32
    %c0_i32_0 = arith.constant 0 : i32
    return %arg0, %c0_i32 : i32, i32
  }
  func.func @transform_17(%arg0: i32) -> (i32, i32) {
    %c0_i32 = arith.constant 0 : i32
    %c0_i32_0 = arith.constant 0 : i32
    return %arg0, %c0_i32 : i32, i32
  }
  func.func @transform_18(%arg0: i32) -> (i32, i32) {
    %c0_i32 = arith.constant 0 : i32
    %c0_i32_0 = arith.constant 0 : i32
    return %arg0, %c0_i32 : i32, i32
  }
  func.func @transform_19(%arg0: i32) -> (i32, i32) {
    %c0_i32 = arith.constant 0 : i32
    %c0_i32_0 = arith.constant 0 : i32
    return %arg0, %c0_i32 : i32, i32
  }
}

</mosaic_0001>

<llo_original>
// kernel: icm_forward.1
$region0: #{icm_forward.1}
  #allocation0 [shape = 'u32[]', space=smem, size = 0x4, offset = 0x4, fixed_abs, tag = 'smem constant byte address 0x4 - core index']
  #allocation1 [shape = 'u32[144,128]{1,0:T(1,128)}', space=vmem, size = 0x12000, scoped, tag = 'internal scratch']
  %s0 = inlined_call_operand.vmem [shape: bf16[16,32], index: 0, kind: input, shape index: {}]
  %s1 = inlined_call_operand.vmem [shape: bf16[16,32], index: 1, kind: input, shape index: {}]
  %s2 = inlined_call_operand.vmem [shape: bf16[16,4], index: 2, kind: input, shape index: {}]
  %s3 = inlined_call_operand.hbm [shape: bf16[32,128], index: 3, kind: input, shape index: {}]
  %s4 = inlined_call_operand.hbm [shape: f32[1,128], index: 4, kind: input, shape index: {}]
  %s5 = inlined_call_operand.vmem [shape: bf16[128,128], index: 5, kind: input, shape index: {}]
  %s6 = inlined_call_operand.hbm [shape: f32[1,128], index: 6, kind: input, shape index: {}]
  %s7 = inlined_call_operand.hbm [shape: bf16[128,256], index: 7, kind: input, shape index: {}]
  %s8 = inlined_call_operand.hbm [shape: bf16[128,128], index: 8, kind: input, shape index: {}]
  %s9 = inlined_call_operand.vmem [shape: f32[1,128], index: 9, kind: input, shape index: {}]
  %s10 = inlined_call_operand.hbm [shape: bf16[128,128], index: 10, kind: input, shape index: {}]
  %s11 = inlined_call_operand.vmem [shape: f32[1,128], index: 11, kind: input, shape index: {}]
  %s12 = inlined_call_operand.vmem [shape: bf16[4,128], index: 12, kind: input, shape index: {}]
  %s13 = inlined_call_operand.hbm [shape: f32[1,128], index: 13, kind: input, shape index: {}]
  %s14 = inlined_call_operand.hbm [shape: bf16[128,128], index: 14, kind: input, shape index: {}]
  %s15 = inlined_call_operand.vmem [shape: f32[1,128], index: 15, kind: input, shape index: {}]
  %s16 = inlined_call_operand.vmem [shape: f32[16,128], index: 16, kind: output, shape index: {0}]
  %s17 = inlined_call_operand.vmem [shape: f32[16,128], index: 17, kind: output, shape index: {1}]
  %s18 = inlined_call_operand.vmem [shape: f32[16,128], index: 18, kind: output, shape index: {2}]
  %s19 = inlined_call_operand.vmem [shape: f32[16,128], index: 19, kind: output, shape index: {3}]
  %20 = xla_tuple %s16, %s17, %s18, %s19
  %s21 = sld [smem:[#allocation0]]
  $region130: #{icm_forward.1} parent=0
    _
  %s23 = ssub.s32 1, %s21
  %s24 = scalar_select 0, %s23, %s21
  $region1: #{icm_forward.1} parent=0
    #allocation2 [shape = 'u8[8192]{0}', space=vmem, size = 0x2000, scoped, tag = 'input window, operand 3, single buffered']
    #allocation3 [shape = 's32[1]{0}', space=sflag, size = 0x4, scoped, tag = 'scoped memory for icm_forward.1']
    #allocation4 [shape = 'u8[512]{0}', space=vmem, size = 0x400, scoped, tag = 'input window, operand 4, single buffered']
    #allocation5 [shape = 's32[1]{0}', space=sflag, size = 0x4, scoped, tag = 'scoped memory for icm_forward.1']
    #allocation6 [shape = 'u8[512]{0}', space=vmem, size = 0x400, scoped, tag = 'input window, operand 6, single buffered']
    #allocation7 [shape = 'u8[65536]{0}', space=vmem, size = 0x10000, scoped, tag = 'input window, operand 7, single buffered']
    #allocation8 [shape = 's32[1]{0}', space=sflag, size = 0x4, scoped, tag = 'scoped memory for icm_forward.1']
    #allocation9 [shape = 'u8[32768]{0}', space=vmem, size = 0x8000, scoped, tag = 'input window, operand 8, single buffered']
    #allocation10 [shape = 'u8[32768]{0}', space=vmem, size = 0x8000, scoped, tag = 'input window, operand 10, single buffered']
    #allocation11 [shape = 's32[1]{0}', space=sflag, size = 0x4, scoped, tag = 'scoped memory for icm_forward.1']
    #allocation12 [shape = 'u8[512]{0}', space=vmem, size = 0x400, scoped, tag = 'input window, operand 13, single buffered']
    #allocation13 [shape = 'u8[32768]{0}', space=vmem, size = 0x8000, scoped, tag = 'input window, operand 14, single buffered']
    #allocation14 [shape = 's32[1]{0}', space=sflag, size = 0x4, scoped, tag = 'scoped memory for icm_forward.1']
    %25 = vsyncpa [#allocation3], 0
    %26 = vsyncpa [#allocation5], 0
    %27 = vsyncpa [#allocation8], 0
    %28 = vsyncpa [#allocation11], 0
    %29 = vsyncpa [#allocation14], 0
    // Predicated region
    $region2: #{icm_forward.1} parent=1 // pred_check
      _
    $region3: #{icm_forward.1} parent=1 // pred_check_branch
      %31 = sbr.rel (0) target = $region5
    $region4: #{icm_forward.1} parent=1 // pred_region
      _
    $region5: #{icm_forward.1} parent=1 // pred_fallthru
      _
    // Predicated region
    $region6: #{icm_forward.1} parent=1 // pred_check
      _
    $region7: #{icm_forward.1} parent=1 // pred_check_branch
      %33 = sbr.rel (0) target = $region9
    $region8: #{icm_forward.1} parent=1 // pred_region
      _
    $region9: #{icm_forward.1} parent=1 // pred_fallthru
      _
    // Predicated region
    $region10: #{icm_forward.1} parent=1 // pred_check
      _
    $region11: #{icm_forward.1} parent=1 // pred_check_branch
      %35 = sbr.rel (0) target = $region13
    $region12: #{icm_forward.1} parent=1 // pred_region
      _
    $region13: #{icm_forward.1} parent=1 // pred_fallthru
      _
    // Predicated region
    $region14: #{icm_forward.1} parent=1 // pred_check
      _
    $region15: #{icm_forward.1} parent=1 // pred_check_branch
      %37 = sbr.rel (0) target = $region17
    $region16: #{icm_forward.1} parent=1 // pred_region
      %s39 = ssub.s32 256, 256
      %40 = vsyncadd [#allocation3], %s39
      %s41 = sshll.u32 [#allocation2], 4
      %s42 = int_to_ptr.vmem [resolvable:$true] %s41
      %47 = dma.hbm_to_vmem [thread:$0]  %s3, 256, %s42, [#allocation3], 64, 64, 4
    $region17: #{icm_forward.1} parent=1 // pred_fallthru
      _
    // Predicated region
    $region18: #{icm_forward.1} parent=1 // pred_check
      _
    $region19: #{icm_forward.1} parent=1 // pred_check_branch
      %49 = sbr.rel (0) target = $region21
    $region20: #{icm_forward.1} parent=1 // pred_region
      %s51 = ssub.s32 16, 16
      %52 = vsyncadd [#allocation5], %s51
      %s54 = sshll.u32 [#allocation4], 4
      %s55 = int_to_ptr.vmem [resolvable:$true] %s54
      %57 = dma.hbm_to_vmem [thread:$0]  %s4, 16, %s55, [#allocation5]
    $region21: #{icm_forward.1} parent=1 // pred_fallthru
      _
    // Predicated region
    $region22: #{icm_forward.1} parent=1 // pred_check
      _
    $region23: #{icm_forward.1} parent=1 // pred_check_branch
      %59 = sbr.rel (0) target = $region25
    $region24: #{icm_forward.1} parent=1 // pred_region
      _
    $region25: #{icm_forward.1} parent=1 // pred_fallthru
      _
    // Predicated region
    $region26: #{icm_forward.1} parent=1 // pred_check
      _
    $region27: #{icm_forward.1} parent=1 // pred_check_branch
      %61 = sbr.rel (0) target = $region29
    $region28: #{icm_forward.1} parent=1 // pred_region
      %s63 = ssub.s32 16, 16
      %64 = vsyncadd [#allocation5], %s63
      %s66 = sshll.u32 [#allocation6], 4
      %s67 = int_to_ptr.vmem [resolvable:$true] %s66
      %69 = dma.hbm_to_vmem [thread:$0]  %s6, 16, %s67, [#allocation5]
    $region29: #{icm_forward.1} parent=1 // pred_fallthru
      _
    // Predicated region
    $region30: #{icm_forward.1} parent=1 // pred_check
      _
    $region31: #{icm_forward.1} parent=1 // pred_check_branch
      %71 = sbr.rel (0) target = $region33
    $region32: #{icm_forward.1} parent=1 // pred_region
      %s73 = ssub.s32 2048, 2048
      %74 = vsyncadd [#allocation8], %s73
      %s75 = sshll.u32 [#allocation7], 4
      %s76 = int_to_ptr.vmem [resolvable:$true] %s75
      %81 = dma.hbm_to_vmem [thread:$0]  %s7, 2048, %s76, [#allocation8], 128, 128, 8
    $region33: #{icm_forward.1} parent=1 // pred_fallthru
      _
    // Predicated region
    $region34: #{icm_forward.1} parent=1 // pred_check
      _
    $region35: #{icm_forward.1} parent=1 // pred_check_branch
      %83 = sbr.rel (0) target = $region37
    $region36: #{icm_forward.1} parent=1 // pred_region
      %s85 = ssub.s32 1024, 1024
      %86 = vsyncadd [#allocation8], %s85
      %s87 = sshll.u32 [#allocation9], 4
      %s88 = int_to_ptr.vmem [resolvable:$true] %s87
      %93 = dma.hbm_to_vmem [thread:$0]  %s8, 1024, %s88, [#allocation8], 64, 64, 4
    $region37: #{icm_forward.1} parent=1 // pred_fallthru
      _
    // Predicated region
    $region38: #{icm_forward.1} parent=1 // pred_check
      _
    $region39: #{icm_forward.1} parent=1 // pred_check_branch
      %95 = sbr.rel (0) target = $region41
    $region40: #{icm_forward.1} parent=1 // pred_region
      _
    $region41: #{icm_forward.1} parent=1 // pred_fallthru
      _
    // Predicated region
    $region42: #{icm_forward.1} parent=1 // pred_check
      _
    $region43: #{icm_forward.1} parent=1 // pred_check_branch
      %97 = sbr.rel (0) target = $region45
    $region44: #{icm_forward.1} parent=1 // pred_region
      %s99 = ssub.s32 1024, 1024
      %100 = vsyncadd [#allocation11], %s99
      %s101 = sshll.u32 [#allocation10], 4
      %s102 = int_to_ptr.vmem [resolvable:$true] %s101
      %107 = dma.hbm_to_vmem [thread:$0]  %s10, 1024, %s102, [#allocation11], 64, 64, 4
    $region45: #{icm_forward.1} parent=1 // pred_fallthru
      _
    // Predicated region
    $region46: #{icm_forward.1} parent=1 // pred_check
      _
    $region47: #{icm_forward.1} parent=1 // pred_check_branch
      %109 = sbr.rel (0) target = $region49
    $region48: #{icm_forward.1} parent=1 // pred_region
      _
    $region49: #{icm_forward.1} parent=1 // pred_fallthru
      _
    // Predicated region
    $region50: #{icm_forward.1} parent=1 // pred_check
      _
    $region51: #{icm_forward.1} parent=1 // pred_check_branch
      %111 = sbr.rel (0) target = $region53
    $region52: #{icm_forward.1} parent=1 // pred_region
      _
    $region53: #{icm_forward.1} parent=1 // pred_fallthru
      _
    // Predicated region
    $region54: #{icm_forward.1} parent=1 // pred_check
      _
    $region55: #{icm_forward.1} parent=1 // pred_check_branch
      %113 = sbr.rel (0) target = $region57
    $region56: #{icm_forward.1} parent=1 // pred_region
      %s115 = ssub.s32 16, 16
      %116 = vsyncadd [#allocation11], %s115
      %s118 = sshll.u32 [#allocation12], 4
      %s119 = int_to_ptr.vmem [resolvable:$true] %s118
      %121 = dma.hbm_to_vmem [thread:$0]  %s13, 16, %s119, [#allocation11]
    $region57: #{icm_forward.1} parent=1 // pred_fallthru
      _
    // Predicated region
    $region58: #{icm_forward.1} parent=1 // pred_check
      _
    $region59: #{icm_forward.1} parent=1 // pred_check_branch
      %123 = sbr.rel (0) target = $region61
    $region60: #{icm_forward.1} parent=1 // pred_region
      %s125 = ssub.s32 1024, 1024
      %126 = vsyncadd [#allocation14], %s125
      %s127 = sshll.u32 [#allocation13], 4
      %s128 = int_to_ptr.vmem [resolvable:$true] %s127
      %133 = dma.hbm_to_vmem [thread:$0]  %s14, 1024, %s128, [#allocation14], 64, 64, 4
    $region61: #{icm_forward.1} parent=1 // pred_fallthru
      _
    // Predicated region
    $region62: #{icm_forward.1} parent=1 // pred_check
      _
    $region63: #{icm_forward.1} parent=1 // pred_check_branch
      %135 = sbr.rel (0) target = $region65
    $region64: #{icm_forward.1} parent=1 // pred_region
      _
    $region65: #{icm_forward.1} parent=1 // pred_fallthru
      _
    // Predicated region
    $region66: #{icm_forward.1} parent=1 // pred_check
      _
    $region67: #{icm_forward.1} parent=1 // pred_check_branch
      %137 = sbr.rel (0) target = $region69
    $region68: #{icm_forward.1} parent=1 // pred_region
      %138 = dma.done [#allocation3], 256
    $region69: #{icm_forward.1} parent=1 // pred_fallthru
      _
    // Predicated region
    $region70: #{icm_forward.1} parent=1 // pred_check
      _
    $region71: #{icm_forward.1} parent=1 // pred_check_branch
      %140 = sbr.rel (0) target = $region73
    $region72: #{icm_forward.1} parent=1 // pred_region
      %141 = dma.done [#allocation5], 16
    $region73: #{icm_forward.1} parent=1 // pred_fallthru
      _
    // Predicated region
    $region74: #{icm_forward.1} parent=1 // pred_check
      _
    $region75: #{icm_forward.1} parent=1 // pred_check_branch
      %143 = sbr.rel (0) target = $region77
    $region76: #{icm_forward.1} parent=1 // pred_region
      %144 = dma.done [#allocation5], 16
    $region77: #{icm_forward.1} parent=1 // pred_fallthru
      _
    // Predicated region
    $region78: #{icm_forward.1} parent=1 // pred_check
      _
    $region79: #{icm_forward.1} parent=1 // pred_check_branch
      %146 = sbr.rel (0) target = $region81
    $region80: #{icm_forward.1} parent=1 // pred_region
      %147 = dma.done [#allocation8], 2048
    $region81: #{icm_forward.1} parent=1 // pred_fallthru
      _
    // Predicated region
    $region82: #{icm_forward.1} parent=1 // pred_check
      _
    $region83: #{icm_forward.1} parent=1 // pred_check_branch
      %149 = sbr.rel (0) target = $region85
    $region84: #{icm_forward.1} parent=1 // pred_region
      %150 = dma.done [#allocation8], 1024
    $region85: #{icm_forward.1} parent=1 // pred_fallthru
      _
    // Predicated region
    $region86: #{icm_forward.1} parent=1 // pred_check
      _
    $region87: #{icm_forward.1} parent=1 // pred_check_branch
      %152 = sbr.rel (0) target = $region89
    $region88: #{icm_forward.1} parent=1 // pred_region
      %153 = dma.done [#allocation11], 1024
    $region89: #{icm_forward.1} parent=1 // pred_fallthru
      _
    // Predicated region
    $region90: #{icm_forward.1} parent=1 // pred_check
      _
    $region91: #{icm_forward.1} parent=1 // pred_check_branch
      %155 = sbr.rel (0) target = $region93
    $region92: #{icm_forward.1} parent=1 // pred_region
      %156 = dma.done [#allocation11], 16
    $region93: #{icm_forward.1} parent=1 // pred_fallthru
      _
    // Predicated region
    $region94: #{icm_forward.1} parent=1 // pred_check
      _
    $region95: #{icm_forward.1} parent=1 // pred_check_branch
      %158 = sbr.rel (0) target = $region97
    $region96: #{icm_forward.1} parent=1 // pred_region
      %159 = dma.done [#allocation14], 1024
    $region97: #{icm_forward.1} parent=1 // pred_fallthru
      _
    %v161 = vld [vmem:[%s0] sm:$0xf]
    %v162 = vld [vmem:[%s0 + $0x4] sm:$0xf]
    %v163 = vld [vmem:[%s1] sm:$0xf]
    %v164 = vld [vmem:[%s1 + $0x4] sm:$0xf]
    %v167 = vunpack.c.l.b16 %v161
    %v168 = vunpack.c.l.b16 %v162
    %v169 = vpack.c.b16 %v168, %v167
    %v172 = vunpack.c.l.b16 %v163
    %v173 = vunpack.c.l.b16 %v164
    %v174 = vpack.c.b16 %v173, %v172
    %v175 = vld [vmem:[#allocation2] sm:$0xf]
    %v176 = vld [vmem:[#allocation2 + $0x4] sm:$0xf]
    %v177 = vld [vmem:[#allocation2 + $0x8] sm:$0xf]
    %v178 = vld [vmem:[#allocation2 + $0xc] sm:$0xf]
    %v179 = vld [vmem:[#allocation4] sm:$0x1]
    %v181 = vlaneseq
    %v182 = vshrl.u32 %v181, 7
    %v183 = vsub.s32 0, %v182
    %v184 = vrot.slane %v179, %v183
    %v190 = vunpack.c.l.b16 %v175
    %v191 = vunpack.c.l.b16 %v176
    %v192 = vunpack.c.l.b16 %v177
    %v193 = vunpack.c.l.b16 %v178
    %v194 = vpack.c.b16 %v191, %v190
    %v195 = vpack.c.b16 %v193, %v192
    %vm198 = vcmask 261120
    %v200 = vsel %vm198, %v169, 0
    %v203 = vsel %vm198, %v174, 0
    %205 = vmatprep.subr.bf16.mxu0 0
    %206 = vmatpush1.bf16.msra.mxu0 %v194
    %207 = vmatprep.subr.bf16.mxu0 0
    %208 = vmatpush1.bf16.msra.mxu0 %v195
    %209 = vmatprep.subr.bf16.mxu0 0
    %210 = vmatpush1.bf16.msra.mxu0 0
    %211 = vmatprep.subr.bf16.mxu0 0
    %212 = vmatpush1.bf16.msra.mxu0 0
    %213 = vmatprep.subr.bf16.mxu0 0
    %214 = vmatpush1.bf16.msra.mxu0 0
    %215 = vmatprep.subr.bf16.mxu0 0
    %216 = vmatpush1.bf16.msra.mxu0 0
    %217 = vmatprep.subr.bf16.mxu0 0
    %218 = vmatpush1.bf16.msra.mxu0 0
    %219 = vmatprep.subr.bf16.mxu0 0
    %220 = vmatpush1.bf16.msra.mxu0 0
    %221 = vmatprep.subr.bf16.mxu0 0
    %222 = vmatpush1.bf16.msra.mxu0 0
    %223 = vmatprep.subr.bf16.mxu0 0
    %224 = vmatpush1.bf16.msra.mxu0 0
    %225 = vmatprep.subr.bf16.mxu0 0
    %226 = vmatpush1.bf16.msra.mxu0 0
    %227 = vmatprep.subr.bf16.mxu0 0
    %228 = vmatpush1.bf16.msra.mxu0 0
    %229 = vmatprep.subr.bf16.mxu0 0
    %230 = vmatpush1.bf16.msra.mxu0 0
    %231 = vmatprep.subr.bf16.mxu0 0
    %232 = vmatpush1.bf16.msra.mxu0 0
    %233 = vmatprep.subr.bf16.mxu0 0
    %234 = vmatpush1.bf16.msra.mxu0 0
    %235 = vmatprep.subr.bf16.mxu0 0
    %236 = vmatpush1.bf16.msra.mxu0 0
    %237 = vmatprep.mubr.bf16.mxu0 0
    %238 = vmatmul.mubr.bf16.gmra.mrb[0].mxu0 %v200
    %v239 = vpop.f32.mrb[0].mxu0
    %v240 = vadd.f32 %v184, %v239
    %v241 = vpop.f32.mrb[0].mxu0
    %v242 = vpop.f32.mrb[0].mxu0
    %v243 = vadd.f32 %v184, %v242
    %v244 = vpop.f32.mrb[0].mxu0
    %245 = vmatprep.mubr.bf16.mxu0 0
    %246 = vmatmul.mubr.bf16.gmra.mrb[0].mxu0 %v203
    %v247 = vpop.f32.mrb[0].mxu0
    %v248 = vadd.f32 %v184, %v247
    %v249 = vpop.f32.mrb[0].mxu0
    %v250 = vpop.f32.mrb[0].mxu0
    %v251 = vadd.f32 %v184, %v250
    %v252 = vpop.f32.mrb[0].mxu0
    %253 = vdwg.mxu0
    %v254 = vmax.f32 %v240, 0.0
    %v255 = vmax.f32 %v243, 0.0
    %v256 = vmax.f32 %v248, 0.0
    %v257 = vmax.f32 %v251, 0.0
    %v258 = vpack.c.bf16 %v255, %v254
    %v259 = vpack.c.bf16 %v257, %v256
    %v260 = vld [vmem:[%s5] sm:$0xf]
    %v261 = vld [vmem:[%s5 + $0x4] sm:$0xf]
    %v262 = vld [vmem:[%s5 + $0x8] sm:$0xf]
    %v263 = vld [vmem:[%s5 + $0xc] sm:$0xf]
    %v264 = vld [vmem:[%s5 + $0x10] sm:$0xf]
    %v265 = vld [vmem:[%s5 + $0x14] sm:$0xf]
    %v266 = vld [vmem:[%s5 + $0x18] sm:$0xf]
    %v267 = vld [vmem:[%s5 + $0x1c] sm:$0xf]
    %v268 = vld [vmem:[%s5 + $0x20] sm:$0xf]
    %v269 = vld [vmem:[%s5 + $0x24] sm:$0xf]
    %v270 = vld [vmem:[%s5 + $0x28] sm:$0xf]
    %v271 = vld [vmem:[%s5 + $0x2c] sm:$0xf]
    %v272 = vld [vmem:[%s5 + $0x30] sm:$0xf]
    %v273 = vld [vmem:[%s5 + $0x34] sm:$0xf]
    %v274 = vld [vmem:[%s5 + $0x38] sm:$0xf]
    %v275 = vld [vmem:[%s5 + $0x3c] sm:$0xf]
    %v276 = vld [vmem:[#allocation6] sm:$0x1]
    %v278 = vlaneseq
    %v279 = vshrl.u32 %v278, 7
    %v280 = vsub.s32 0, %v279
    %v281 = vrot.slane %v276, %v280
    %v299 = vunpack.c.l.b16 %v260
    %v300 = vunpack.c.l.b16 %v261
    %v301 = vunpack.c.l.b16 %v262
    %v302 = vunpack.c.l.b16 %v263
    %v303 = vunpack.c.l.b16 %v264
    %v304 = vunpack.c.l.b16 %v265
    %v305 = vunpack.c.l.b16 %v266
    %v306 = vunpack.c.l.b16 %v267
    %v307 = vunpack.c.l.b16 %v268
    %v308 = vunpack.c.l.b16 %v269
    %v309 = vunpack.c.l.b16 %v270
    %v310 = vunpack.c.l.b16 %v271
    %v311 = vunpack.c.l.b16 %v272
    %v312 = vunpack.c.l.b16 %v273
    %v313 = vunpack.c.l.b16 %v274
    %v314 = vunpack.c.l.b16 %v275
    %v315 = vpack.c.b16 %v300, %v299
    %v316 = vpack.c.b16 %v302, %v301
    %v317 = vpack.c.b16 %v304, %v303
    %v318 = vpack.c.b16 %v306, %v305
    %v319 = vpack.c.b16 %v308, %v307
    %v320 = vpack.c.b16 %v310, %v309
    %v321 = vpack.c.b16 %v312, %v311
    %v322 = vpack.c.b16 %v314, %v313
    %331 = vmatprep.subr.bf16.mxu0 0
    %332 = vmatpush1.bf16.msra.mxu0 %v315
    %333 = vmatprep.subr.bf16.mxu0 0
    %334 = vmatpush1.bf16.msra.mxu0 %v316
    %335 = vmatprep.subr.bf16.mxu0 0
    %336 = vmatpush1.bf16.msra.mxu0 %v317
    %337 = vmatprep.subr.bf16.mxu0 0
    %338 = vmatpush1.bf16.msra.mxu0 %v318
    %339 = vmatprep.subr.bf16.mxu0 0
    %340 = vmatpush1.bf16.msra.mxu0 %v319
    %341 = vmatprep.subr.bf16.mxu0 0
    %342 = vmatpush1.bf16.msra.mxu0 %v320
    %343 = vmatprep.subr.bf16.mxu0 0
    %344 = vmatpush1.bf16.msra.mxu0 %v321
    %345 = vmatprep.subr.bf16.mxu0 0
    %346 = vmatpush1.bf16.msra.mxu0 %v322
    %347 = vmatprep.subr.bf16.mxu0 0
    %348 = vmatpush1.bf16.msra.mxu0 0
    %349 = vmatprep.subr.bf16.mxu0 0
    %350 = vmatpush1.bf16.msra.mxu0 0
    %351 = vmatprep.subr.bf16.mxu0 0
    %352 = vmatpush1.bf16.msra.mxu0 0
    %353 = vmatprep.subr.bf16.mxu0 0
    %354 = vmatpush1.bf16.msra.mxu0 0
    %355 = vmatprep.subr.bf16.mxu0 0
    %356 = vmatpush1.bf16.msra.mxu0 0
    %357 = vmatprep.subr.bf16.mxu0 0
    %358 = vmatpush1.bf16.msra.mxu0 0
    %359 = vmatprep.subr.bf16.mxu0 0
    %360 = vmatpush1.bf16.msra.mxu0 0
    %361 = vmatprep.subr.bf16.mxu0 0
    %362 = vmatpush1.bf16.msra.mxu0 0
    %363 = vmatprep.mubr.bf16.mxu0 0
    %364 = vmatmul.mubr.bf16.gmra.mrb[0].mxu0 %v258
    %v365 = vpop.f32.mrb[0].mxu0
    %v366 = vadd.f32 %v281, %v365
    %v367 = vpop.f32.mrb[0].mxu0
    %v368 = vpop.f32.mrb[0].mxu0
    %v369 = vadd.f32 %v281, %v368
    %v370 = vpop.f32.mrb[0].mxu0
    %371 = vmatprep.mubr.bf16.mxu0 0
    %372 = vmatmul.mubr.bf16.gmra.mrb[0].mxu0 %v259
    %v373 = vpop.f32.mrb[0].mxu0
    %v374 = vadd.f32 %v281, %v373
    %v375 = vpop.f32.mrb[0].mxu0
    %v376 = vpop.f32.mrb[0].mxu0
    %v377 = vadd.f32 %v281, %v376
    %v378 = vpop.f32.mrb[0].mxu0
    %379 = vdwg.mxu0
    %380 = vst [vmem:[%s16] sm:$0xff] %v366
    %381 = vst [vmem:[%s16 + $0x8] sm:$0xff] %v369
    %382 = vst [vmem:[%s17] sm:$0xff] %v374
    %383 = vst [vmem:[%s17 + $0x8] sm:$0xff] %v377
    %v384 = vpack.c.bf16 %v369, %v366
    %v385 = vpack.c.bf16 %v377, %v374
    %v386 = vld [vmem:[#allocation7] sm:$0xff]
    %v387 = vld [vmem:[#allocation7 + $0x8] sm:$0xff]
    %v388 = vld [vmem:[#allocation7 + $0x10] sm:$0xff]
    %v389 = vld [vmem:[#allocation7 + $0x18] sm:$0xff]
    %v390 = vld [vmem:[#allocation7 + $0x20] sm:$0xff]
    %v391 = vld [vmem:[#allocation7 + $0x28] sm:$0xff]
    %v392 = vld [vmem:[#allocation7 + $0x30] sm:$0xff]
    %v393 = vld [vmem:[#allocation7 + $0x38] sm:$0xff]
    %v394 = vld [vmem:[#allocation7 + $0x40] sm:$0xff]
    %v395 = vld [vmem:[#allocation7 + $0x48] sm:$0xff]
    %v396 = vld [vmem:[#allocation7 + $0x50] sm:$0xff]
    %v397 = vld [vmem:[#allocation7 + $0x58] sm:$0xff]
    %v398 = vld [vmem:[#allocation7 + $0x60] sm:$0xff]
    %v399 = vld [vmem:[#allocation7 + $0x68] sm:$0xff]
    %v400 = vld [vmem:[#allocation7 + $0x70] sm:$0xff]
    %v401 = vld [vmem:[#allocation7 + $0x78] sm:$0xff]
    %v418 = vunpack.c.l.b16 %v386
    %v419 = vunpack.c.h.b16 %v386
    %v420 = vunpack.c.l.b16 %v387
    %v421 = vunpack.c.h.b16 %v387
    %v422 = vunpack.c.l.b16 %v388
    %v423 = vunpack.c.h.b16 %v388
    %v424 = vunpack.c.l.b16 %v389
    %v425 = vunpack.c.h.b16 %v389
    %v426 = vunpack.c.l.b16 %v390
    %v427 = vunpack.c.h.b16 %v390
    %v428 = vunpack.c.l.b16 %v391
    %v429 = vunpack.c.h.b16 %v391
    %v430 = vunpack.c.l.b16 %v392
    %v431 = vunpack.c.h.b16 %v392
    %v432 = vunpack.c.l.b16 %v393
    %v433 = vunpack.c.h.b16 %v393
    %v434 = vunpack.c.l.b16 %v394
    %v435 = vunpack.c.h.b16 %v394
    %v436 = vunpack.c.l.b16 %v395
    %v437 = vunpack.c.h.b16 %v395
    %v438 = vunpack.c.l.b16 %v396
    %v439 = vunpack.c.h.b16 %v396
    %v440 = vunpack.c.l.b16 %v397
    %v441 = vunpack.c.h.b16 %v397
    %v442 = vunpack.c.l.b16 %v398
    %v443 = vunpack.c.h.b16 %v398
    %v444 = vunpack.c.l.b16 %v399
    %v445 = vunpack.c.h.b16 %v399
    %v446 = vunpack.c.l.b16 %v400
    %v447 = vunpack.c.h.b16 %v400
    %v448 = vunpack.c.l.b16 %v401
    %v449 = vunpack.c.h.b16 %v401
    %v450 = vpack.c.b16 %v420, %v418
    %v451 = vpack.c.b16 %v421, %v419
    %v452 = vpack.c.b16 %v424, %v422
    %v453 = vpack.c.b16 %v425, %v423
    %v454 = vpack.c.b16 %v428, %v426
    %v455 = vpack.c.b16 %v429, %v427
    %v456 = vpack.c.b16 %v432, %v430
    %v457 = vpack.c.b16 %v433, %v431
    %v458 = vpack.c.b16 %v436, %v434
    %v459 = vpack.c.b16 %v437, %v435
    %v460 = vpack.c.b16 %v440, %v438
    %v461 = vpack.c.b16 %v441, %v439
    %v462 = vpack.c.b16 %v444, %v442
    %v463 = vpack.c.b16 %v445, %v443
    %v464 = vpack.c.b16 %v448, %v446
    %v465 = vpack.c.b16 %v449, %v447
    %482 = vmatprep.subr.bf16.mxu0 %v451
    %483 = vmatpush1.bf16.msra.mxu0 %v450
    %484 = vmatprep.subr.bf16.mxu0 %v453
    %485 = vmatpush1.bf16.msra.mxu0 %v452
    %486 = vmatprep.subr.bf16.mxu0 %v455
    %487 = vmatpush1.bf16.msra.mxu0 %v454
    %488 = vmatprep.subr.bf16.mxu0 %v457
    %489 = vmatpush1.bf16.msra.mxu0 %v456
    %490 = vmatprep.subr.bf16.mxu0 %v459
    %491 = vmatpush1.bf16.msra.mxu0 %v458
    %492 = vmatprep.subr.bf16.mxu0 %v461
    %493 = vmatpush1.bf16.msra.mxu0 %v460
    %494 = vmatprep.subr.bf16.mxu0 %v463
    %495 = vmatpush1.bf16.msra.mxu0 %v462
    %496 = vmatprep.subr.bf16.mxu0 %v465
    %497 = vmatpush1.bf16.msra.mxu0 %v464
    %498 = vmatprep.subr.bf16.mxu0 0
    %499 = vmatpush1.bf16.msra.mxu0 0
    %500 = vmatprep.subr.bf16.mxu0 0
    %501 = vmatpush1.bf16.msra.mxu0 0
    %502 = vmatprep.subr.bf16.mxu0 0
    %503 = vmatpush1.bf16.msra.mxu0 0
    %504 = vmatprep.subr.bf16.mxu0 0
    %505 = vmatpush1.bf16.msra.mxu0 0
    %506 = vmatprep.subr.bf16.mxu0 0
    %507 = vmatpush1.bf16.msra.mxu0 0
    %508 = vmatprep.subr.bf16.mxu0 0
    %509 = vmatpush1.bf16.msra.mxu0 0
    %510 = vmatprep.subr.bf16.mxu0 0
    %511 = vmatpush1.bf16.msra.mxu0 0
    %512 = vmatprep.subr.bf16.mxu0 0
    %513 = vmatpush1.bf16.msra.mxu0 0
    %514 = vmatprep.mubr.bf16.mxu0 0
    %515 = vmatmul.mubr.bf16.gmra.mrb[0].mxu0 %v384
    %v516 = vpop.f32.mrb[0].mxu0
    %v517 = vadd.f32 0.0, %v516
    %v518 = vpop.f32.mrb[0].mxu0
    %v519 = vadd.f32 0.0, %v518
    %v520 = vpop.f32.mrb[0].mxu0
    %v521 = vadd.f32 0.0, %v520
    %v522 = vpop.f32.mrb[0].mxu0
    %v523 = vadd.f32 0.0, %v522
    %524 = vdwg.mxu0
    %v525 = vld [vmem:[#allocation9] sm:$0xf]
    %v526 = vld [vmem:[#allocation9 + $0x4] sm:$0xf]
    %v527 = vld [vmem:[#allocation9 + $0x8] sm:$0xf]
    %v528 = vld [vmem:[#allocation9 + $0xc] sm:$0xf]
    %v529 = vld [vmem:[#allocation9 + $0x10] sm:$0xf]
    %v530 = vld [vmem:[#allocation9 + $0x14] sm:$0xf]
    %v531 = vld [vmem:[#allocation9 + $0x18] sm:$0xf]
    %v532 = vld [vmem:[#allocation9 + $0x1c] sm:$0xf]
    %v533 = vld [vmem:[#allocation9 + $0x20] sm:$0xf]
    %v534 = vld [vmem:[#allocation9 + $0x24] sm:$0xf]
    %v535 = vld [vmem:[#allocation9 + $0x28] sm:$0xf]
    %v536 = vld [vmem:[#allocation9 + $0x2c] sm:$0xf]
    %v537 = vld [vmem:[#allocation9 + $0x30] sm:$0xf]
    %v538 = vld [vmem:[#allocation9 + $0x34] sm:$0xf]
    %v539 = vld [vmem:[#allocation9 + $0x38] sm:$0xf]
    %v540 = vld [vmem:[#allocation9 + $0x3c] sm:$0xf]
    %v557 = vunpack.c.l.b16 %v525
    %v558 = vunpack.c.l.b16 %v526
    %v559 = vunpack.c.l.b16 %v527
    %v560 = vunpack.c.l.b16 %v528
    %v561 = vunpack.c.l.b16 %v529
    %v562 = vunpack.c.l.b16 %v530
    %v563 = vunpack.c.l.b16 %v531
    %v564 = vunpack.c.l.b16 %v532
    %v565 = vunpack.c.l.b16 %v533
    %v566 = vunpack.c.l.b16 %v534
    %v567 = vunpack.c.l.b16 %v535
    %v568 = vunpack.c.l.b16 %v536
    %v569 = vunpack.c.l.b16 %v537
    %v570 = vunpack.c.l.b16 %v538
    %v571 = vunpack.c.l.b16 %v539
    %v572 = vunpack.c.l.b16 %v540
    %v573 = vpack.c.b16 %v558, %v557
    %v574 = vpack.c.b16 %v560, %v559
    %v575 = vpack.c.b16 %v562, %v561
    %v576 = vpack.c.b16 %v564, %v563
    %v577 = vpack.c.b16 %v566, %v565
    %v578 = vpack.c.b16 %v568, %v567
    %v579 = vpack.c.b16 %v570, %v569
    %v580 = vpack.c.b16 %v572, %v571
    %589 = vmatprep.subr.bf16.mxu0 0
    %590 = vmatpush1.bf16.msra.mxu0 %v573
    %591 = vmatprep.subr.bf16.mxu0 0
    %592 = vmatpush1.bf16.msra.mxu0 %v574
    %593 = vmatprep.subr.bf16.mxu0 0
    %594 = vmatpush1.bf16.msra.mxu0 %v575
    %595 = vmatprep.subr.bf16.mxu0 0
    %596 = vmatpush1.bf16.msra.mxu0 %v576
    %597 = vmatprep.subr.bf16.mxu0 0
    %598 = vmatpush1.bf16.msra.mxu0 %v577
    %599 = vmatprep.subr.bf16.mxu0 0
    %600 = vmatpush1.bf16.msra.mxu0 %v578
    %601 = vmatprep.subr.bf16.mxu0 0
    %602 = vmatpush1.bf16.msra.mxu0 %v579
    %603 = vmatprep.subr.bf16.mxu0 0
    %604 = vmatpush1.bf16.msra.mxu0 %v580
    %605 = vmatprep.subr.bf16.mxu0 0
    %606 = vmatpush1.bf16.msra.mxu0 0
    %607 = vmatprep.subr.bf16.mxu0 0
    %608 = vmatpush1.bf16.msra.mxu0 0
    %609 = vmatprep.subr.bf16.mxu0 0
    %610 = vmatpush1.bf16.msra.mxu0 0
    %611 = vmatprep.subr.bf16.mxu0 0
    %612 = vmatpush1.bf16.msra.mxu0 0
    %613 = vmatprep.subr.bf16.mxu0 0
    %614 = vmatpush1.bf16.msra.mxu0 0
    %615 = vmatprep.subr.bf16.mxu0 0
    %616 = vmatpush1.bf16.msra.mxu0 0
    %617 = vmatprep.subr.bf16.mxu0 0
    %618 = vmatpush1.bf16.msra.mxu0 0
    %619 = vmatprep.subr.bf16.mxu0 0
    %620 = vmatpush1.bf16.msra.mxu0 0
    %621 = vmatprep.mubr.bf16.mxu0 0
    %622 = vmatmul.mubr.bf16.gmra.mrb[0].mxu0 %v385
    %v623 = vpop.f32.mrb[0].mxu0
    %v624 = vadd.f32 0.0, %v623
    %v625 = vpop.f32.mrb[0].mxu0
    %v626 = vpop.f32.mrb[0].mxu0
    %v627 = vadd.f32 0.0, %v626
    %v628 = vpop.f32.mrb[0].mxu0
    %629 = vdwg.mxu0
    %v630 = vadd.f32 %v517, %v624
    %v631 = vadd.f32 %v521, %v627
    %v632 = vld [vmem:[%s9] sm:$0x1]
    %v634 = vlaneseq
    %v635 = vshrl.u32 %v634, 7
    %v636 = vsub.s32 0, %v635
    %v637 = vrot.slane %v632, %v636
    %v639 = vadd.f32 %v630, %v637
    %v640 = vadd.f32 %v631, %v637
    %v641 = vmax.f32 %v639, 0.0
    %v642 = vmax.f32 %v640, 0.0
    %v643 = vpack.c.bf16 %v642, %v641
    %v644 = vld [vmem:[#allocation10] sm:$0xf]
    %v645 = vld [vmem:[#allocation10 + $0x4] sm:$0xf]
    %v646 = vld [vmem:[#allocation10 + $0x8] sm:$0xf]
    %v647 = vld [vmem:[#allocation10 + $0xc] sm:$0xf]
    %v648 = vld [vmem:[#allocation10 + $0x10] sm:$0xf]
    %v649 = vld [vmem:[#allocation10 + $0x14] sm:$0xf]
    %v650 = vld [vmem:[#allocation10 + $0x18] sm:$0xf]
    %v651 = vld [vmem:[#allocation10 + $0x1c] sm:$0xf]
    %v652 = vld [vmem:[#allocation10 + $0x20] sm:$0xf]
    %v653 = vld [vmem:[#allocation10 + $0x24] sm:$0xf]
    %v654 = vld [vmem:[#allocation10 + $0x28] sm:$0xf]
    %v655 = vld [vmem:[#allocation10 + $0x2c] sm:$0xf]
    %v656 = vld [vmem:[#allocation10 + $0x30] sm:$0xf]
    %v657 = vld [vmem:[#allocation10 + $0x34] sm:$0xf]
    %v658 = vld [vmem:[#allocation10 + $0x38] sm:$0xf]
    %v659 = vld [vmem:[#allocation10 + $0x3c] sm:$0xf]
    %v660 = vld [vmem:[%s11] sm:$0x1]
    %v662 = vlaneseq
    %v663 = vshrl.u32 %v662, 7
    %v664 = vsub.s32 0, %v663
    %v665 = vrot.slane %v660, %v664
    %v683 = vunpack.c.l.b16 %v644
    %v684 = vunpack.c.l.b16 %v645
    %v685 = vunpack.c.l.b16 %v646
    %v686 = vunpack.c.l.b16 %v647
    %v687 = vunpack.c.l.b16 %v648
    %v688 = vunpack.c.l.b16 %v649
    %v689 = vunpack.c.l.b16 %v650
    %v690 = vunpack.c.l.b16 %v651
    %v691 = vunpack.c.l.b16 %v652
    %v692 = vunpack.c.l.b16 %v653
    %v693 = vunpack.c.l.b16 %v654
    %v694 = vunpack.c.l.b16 %v655
    %v695 = vunpack.c.l.b16 %v656
    %v696 = vunpack.c.l.b16 %v657
    %v697 = vunpack.c.l.b16 %v658
    %v698 = vunpack.c.l.b16 %v659
    %v699 = vpack.c.b16 %v684, %v683
    %v700 = vpack.c.b16 %v686, %v685
    %v701 = vpack.c.b16 %v688, %v687
    %v702 = vpack.c.b16 %v690, %v689
    %v703 = vpack.c.b16 %v692, %v691
    %v704 = vpack.c.b16 %v694, %v693
    %v705 = vpack.c.b16 %v696, %v695
    %v706 = vpack.c.b16 %v698, %v697
    %715 = vmatprep.subr.bf16.mxu0 0
    %716 = vmatpush1.bf16.msra.mxu0 %v699
    %717 = vmatprep.subr.bf16.mxu0 0
    %718 = vmatpush1.bf16.msra.mxu0 %v700
    %719 = vmatprep.subr.bf16.mxu0 0
    %720 = vmatpush1.bf16.msra.mxu0 %v701
    %721 = vmatprep.subr.bf16.mxu0 0
    %722 = vmatpush1.bf16.msra.mxu0 %v702
    %723 = vmatprep.subr.bf16.mxu0 0
    %724 = vmatpush1.bf16.msra.mxu0 %v703
    %725 = vmatprep.subr.bf16.mxu0 0
    %726 = vmatpush1.bf16.msra.mxu0 %v704
    %727 = vmatprep.subr.bf16.mxu0 0
    %728 = vmatpush1.bf16.msra.mxu0 %v705
    %729 = vmatprep.subr.bf16.mxu0 0
    %730 = vmatpush1.bf16.msra.mxu0 %v706
    %731 = vmatprep.subr.bf16.mxu0 0
    %732 = vmatpush1.bf16.msra.mxu0 0
    %733 = vmatprep.subr.bf16.mxu0 0
    %734 = vmatpush1.bf16.msra.mxu0 0
    %735 = vmatprep.subr.bf16.mxu0 0
    %736 = vmatpush1.bf16.msra.mxu0 0
    %737 = vmatprep.subr.bf16.mxu0 0
    %738 = vmatpush1.bf16.msra.mxu0 0
    %739 = vmatprep.subr.bf16.mxu0 0
    %740 = vmatpush1.bf16.msra.mxu0 0
    %741 = vmatprep.subr.bf16.mxu0 0
    %742 = vmatpush1.bf16.msra.mxu0 0
    %743 = vmatprep.subr.bf16.mxu0 0
    %744 = vmatpush1.bf16.msra.mxu0 0
    %745 = vmatprep.subr.bf16.mxu0 0
    %746 = vmatpush1.bf16.msra.mxu0 0
    %747 = vmatprep.mubr.bf16.mxu0 0
    %748 = vmatmul.mubr.bf16.gmra.mrb[0].mxu0 %v643
    %v749 = vpop.f32.mrb[0].mxu0
    %v750 = vadd.f32 %v665, %v749
    %v751 = vpop.f32.mrb[0].mxu0
    %v752 = vpop.f32.mrb[0].mxu0
    %v753 = vadd.f32 %v665, %v752
    %v754 = vpop.f32.mrb[0].mxu0
    %755 = vdwg.mxu0
    %756 = vst [vmem:[%s18] sm:$0xff] %v750
    %757 = vst [vmem:[%s18 + $0x8] sm:$0xff] %v753
    %v758 = vld [vmem:[%s2] sm:$0xf]
    %v759 = vld [vmem:[%s2 + $0x4] sm:$0xf]
    %v760 = vld [vmem:[%s12] sm:$0x3]
    %v763 = vunpack.c.l.b16 %v758
    %v764 = vunpack.c.l.b16 %v759
    %v765 = vpack.c.b16 %v764, %v763
    %vm766 = vcmask 31744
    %v768 = vsel %vm766, %v765, 0
    %vm770 = vcmask 1041408
    %v772 = vsel %vm770, %v760, 0
    %774 = vmatprep.subr.bf16.mxu0 0
    %775 = vmatpush1.bf16.msra.mxu0 %v772
    %776 = vmatprep.subr.bf16.mxu0 0
    %777 = vmatpush1.bf16.msra.mxu0 0
    %778 = vmatprep.subr.bf16.mxu0 0
    %779 = vmatpush1.bf16.msra.mxu0 0
    %780 = vmatprep.subr.bf16.mxu0 0
    %781 = vmatpush1.bf16.msra.mxu0 0
    %782 = vmatprep.subr.bf16.mxu0 0
    %783 = vmatpush1.bf16.msra.mxu0 0
    %784 = vmatprep.subr.bf16.mxu0 0
    %785 = vmatpush1.bf16.msra.mxu0 0
    %786 = vmatprep.subr.bf16.mxu0 0
    %787 = vmatpush1.bf16.msra.mxu0 0
    %788 = vmatprep.subr.bf16.mxu0 0
    %789 = vmatpush1.bf16.msra.mxu0 0
    %790 = vmatprep.subr.bf16.mxu0 0
    %791 = vmatpush1.bf16.msra.mxu0 0
    %792 = vmatprep.subr.bf16.mxu0 0
    %793 = vmatpush1.bf16.msra.mxu0 0
    %794 = vmatprep.subr.bf16.mxu0 0
    %795 = vmatpush1.bf16.msra.mxu0 0
    %796 = vmatprep.subr.bf16.mxu0 0
    %797 = vmatpush1.bf16.msra.mxu0 0
    %798 = vmatprep.subr.bf16.mxu0 0
    %799 = vmatpush1.bf16.msra.mxu0 0
    %800 = vmatprep.subr.bf16.mxu0 0
    %801 = vmatpush1.bf16.msra.mxu0 0
    %802 = vmatprep.subr.bf16.mxu0 0
    %803 = vmatpush1.bf16.msra.mxu0 0
    %804 = vmatprep.subr.bf16.mxu0 0
    %805 = vmatpush1.bf16.msra.mxu0 0
    %806 = vmatprep.mubr.bf16.mxu0 0
    %807 = vmatmul.mubr.bf16.gmra.mrb[0].mxu0 %v768
    %v808 = vpop.f32.mrb[0].mxu0
    %v809 = vadd.f32 0.0, %v808
    %v810 = vpop.f32.mrb[0].mxu0
    %v811 = vpop.f32.mrb[0].mxu0
    %v812 = vadd.f32 0.0, %v811
    %v813 = vpop.f32.mrb[0].mxu0
    %814 = vdwg.mxu0
    %v815 = vadd.f32 %v519, %v809
    %v816 = vadd.f32 %v523, %v812
    %v817 = vld [vmem:[#allocation12] sm:$0x1]
    %v819 = vlaneseq
    %v820 = vshrl.u32 %v819, 7
    %v821 = vsub.s32 0, %v820
    %v822 = vrot.slane %v817, %v821
    %v824 = vadd.f32 %v815, %v822
    %v825 = vadd.f32 %v816, %v822
    %v826 = vmax.f32 %v824, 0.0
    %v827 = vmax.f32 %v825, 0.0
    %v828 = vpack.c.bf16 %v827, %v826
    %v829 = vld [vmem:[#allocation13] sm:$0xf]
    %v830 = vld [vmem:[#allocation13 + $0x4] sm:$0xf]
    %v831 = vld [vmem:[#allocation13 + $0x8] sm:$0xf]
    %v832 = vld [vmem:[#allocation13 + $0xc] sm:$0xf]
    %v833 = vld [vmem:[#allocation13 + $0x10] sm:$0xf]
    %v834 = vld [vmem:[#allocation13 + $0x14] sm:$0xf]
    %v835 = vld [vmem:[#allocation13 + $0x18] sm:$0xf]
    %v836 = vld [vmem:[#allocation13 + $0x1c] sm:$0xf]
    %v837 = vld [vmem:[#allocation13 + $0x20] sm:$0xf]
    %v838 = vld [vmem:[#allocation13 + $0x24] sm:$0xf]
    %v839 = vld [vmem:[#allocation13 + $0x28] sm:$0xf]
    %v840 = vld [vmem:[#allocation13 + $0x2c] sm:$0xf]
    %v841 = vld [vmem:[#allocation13 + $0x30] sm:$0xf]
    %v842 = vld [vmem:[#allocation13 + $0x34] sm:$0xf]
    %v843 = vld [vmem:[#allocation13 + $0x38] sm:$0xf]
    %v844 = vld [vmem:[#allocation13 + $0x3c] sm:$0xf]
    %v845 = vld [vmem:[%s15] sm:$0x1]
    %v847 = vlaneseq
    %v848 = vshrl.u32 %v847, 7
    %v849 = vsub.s32 0, %v848
    %v850 = vrot.slane %v845, %v849
    %v868 = vunpack.c.l.b16 %v829
    %v869 = vunpack.c.l.b16 %v830
    %v870 = vunpack.c.l.b16 %v831
    %v871 = vunpack.c.l.b16 %v832
    %v872 = vunpack.c.l.b16 %v833
    %v873 = vunpack.c.l.b16 %v834
    %v874 = vunpack.c.l.b16 %v835
    %v875 = vunpack.c.l.b16 %v836
    %v876 = vunpack.c.l.b16 %v837
    %v877 = vunpack.c.l.b16 %v838
    %v878 = vunpack.c.l.b16 %v839
    %v879 = vunpack.c.l.b16 %v840
    %v880 = vunpack.c.l.b16 %v841
    %v881 = vunpack.c.l.b16 %v842
    %v882 = vunpack.c.l.b16 %v843
    %v883 = vunpack.c.l.b16 %v844
    %v884 = vpack.c.b16 %v869, %v868
    %v885 = vpack.c.b16 %v871, %v870
    %v886 = vpack.c.b16 %v873, %v872
    %v887 = vpack.c.b16 %v875, %v874
    %v888 = vpack.c.b16 %v877, %v876
    %v889 = vpack.c.b16 %v879, %v878
    %v890 = vpack.c.b16 %v881, %v880
    %v891 = vpack.c.b16 %v883, %v882
    %900 = vmatprep.subr.bf16.mxu0 0
    %901 = vmatpush1.bf16.msra.mxu0 %v884
    %902 = vmatprep.subr.bf16.mxu0 0
    %903 = vmatpush1.bf16.msra.mxu0 %v885
    %904 = vmatprep.subr.bf16.mxu0 0
    %905 = vmatpush1.bf16.msra.mxu0 %v886
    %906 = vmatprep.subr.bf16.mxu0 0
    %907 = vmatpush1.bf16.msra.mxu0 %v887
    %908 = vmatprep.subr.bf16.mxu0 0
    %909 = vmatpush1.bf16.msra.mxu0 %v888
    %910 = vmatprep.subr.bf16.mxu0 0
    %911 = vmatpush1.bf16.msra.mxu0 %v889
    %912 = vmatprep.subr.bf16.mxu0 0
    %913 = vmatpush1.bf16.msra.mxu0 %v890
    %914 = vmatprep.subr.bf16.mxu0 0
    %915 = vmatpush1.bf16.msra.mxu0 %v891
    %916 = vmatprep.subr.bf16.mxu0 0
    %917 = vmatpush1.bf16.msra.mxu0 0
    %918 = vmatprep.subr.bf16.mxu0 0
    %919 = vmatpush1.bf16.msra.mxu0 0
    %920 = vmatprep.subr.bf16.mxu0 0
    %921 = vmatpush1.bf16.msra.mxu0 0
    %922 = vmatprep.subr.bf16.mxu0 0
    %923 = vmatpush1.bf16.msra.mxu0 0
    %924 = vmatprep.subr.bf16.mxu0 0
    %925 = vmatpush1.bf16.msra.mxu0 0
    %926 = vmatprep.subr.bf16.mxu0 0
    %927 = vmatpush1.bf16.msra.mxu0 0
    %928 = vmatprep.subr.bf16.mxu0 0
    %929 = vmatpush1.bf16.msra.mxu0 0
    %930 = vmatprep.subr.bf16.mxu0 0
    %931 = vmatpush1.bf16.msra.mxu0 0
    %932 = vmatprep.mubr.bf16.mxu0 0
    %933 = vmatmul.mubr.bf16.gmra.mrb[0].mxu0 %v828
    %v934 = vpop.f32.mrb[0].mxu0
    %v935 = vadd.f32 %v850, %v934
    %v936 = vpop.f32.mrb[0].mxu0
    %v937 = vpop.f32.mrb[0].mxu0
    %v938 = vadd.f32 %v850, %v937
    %v939 = vpop.f32.mrb[0].mxu0
    %940 = vdwg.mxu0
    %941 = vst [vmem:[%s19] sm:$0xff] %v935
    %942 = vst [vmem:[%s19 + $0x8] sm:$0xff] %v938
    // Predicated region
    $region98: #{icm_forward.1} parent=1 // pred_check
      _
    $region99: #{icm_forward.1} parent=1 // pred_check_branch
      %944 = sbr.rel (0) target = $region101
    $region100: #{icm_forward.1} parent=1 // pred_region
      _
    $region101: #{icm_forward.1} parent=1 // pred_fallthru
      _
    // Predicated region
    $region102: #{icm_forward.1} parent=1 // pred_check
      _
    $region103: #{icm_forward.1} parent=1 // pred_check_branch
      %946 = sbr.rel (0) target = $region105
    $region104: #{icm_forward.1} parent=1 // pred_region
      _
    $region105: #{icm_forward.1} parent=1 // pred_fallthru
      _
    // Predicated region
    $region106: #{icm_forward.1} parent=1 // pred_check
      _
    $region107: #{icm_forward.1} parent=1 // pred_check_branch
      %948 = sbr.rel (0) target = $region109
    $region108: #{icm_forward.1} parent=1 // pred_region
      _
    $region109: #{icm_forward.1} parent=1 // pred_fallthru
      _
    // Predicated region
    $region110: #{icm_forward.1} parent=1 // pred_check
      _
    $region111: #{icm_forward.1} parent=1 // pred_check_branch
      %950 = sbr.rel (0) target = $region113
    $region112: #{icm_forward.1} parent=1 // pred_region
      _
    $region113: #{icm_forward.1} parent=1 // pred_fallthru
      _
    // Predicated region
    $region114: #{icm_forward.1} parent=1 // pred_check
      _
    $region115: #{icm_forward.1} parent=1 // pred_check_branch
      %952 = sbr.rel (0) target = $region117
    $region116: #{icm_forward.1} parent=1 // pred_region
      _
    $region117: #{icm_forward.1} parent=1 // pred_fallthru
      _
    // Predicated region
    $region118: #{icm_forward.1} parent=1 // pred_check
      _
    $region119: #{icm_forward.1} parent=1 // pred_check_branch
      %954 = sbr.rel (0) target = $region121
    $region120: #{icm_forward.1} parent=1 // pred_region
      _
    $region121: #{icm_forward.1} parent=1 // pred_fallthru
      _
    // Predicated region
    $region122: #{icm_forward.1} parent=1 // pred_check
      _
    $region123: #{icm_forward.1} parent=1 // pred_check_branch
      %956 = sbr.rel (0) target = $region125
    $region124: #{icm_forward.1} parent=1 // pred_region
      _
    $region125: #{icm_forward.1} parent=1 // pred_fallthru
      _
    // Predicated region
    $region126: #{icm_forward.1} parent=1 // pred_check
      _
    $region127: #{icm_forward.1} parent=1 // pred_check_branch
      %958 = sbr.rel (0) target = $region129
    $region128: #{icm_forward.1} parent=1 // pred_region
      _
    $region129: #{icm_forward.1} parent=1 // pred_fallthru
      _
    %959 = vsyncpa [#allocation3], 1
    %960 = vsyncpa [#allocation5], 1
    %961 = vsyncpa [#allocation8], 1
    %962 = vsyncpa [#allocation11], 1
    %963 = vsyncpa [#allocation14], 1

</llo_original>
